<compile_context>
chip_gen: v6e
topology: v6e:2x2x1
jax: 0.10.0
libtpu: 0.0.40
codegen_flags: <defaults>
</compile_context>

<pallas_src>
import jax
import jax.numpy as jnp
from jax.experimental import pallas as pl
from jax.experimental.pallas import tpu as pltpu


def _identity_kernel(x_ref, o_ref):
    # Straight tile copy: the only work Identity could possibly need.
    o_ref[...] = x_ref[...]


# Target bytes per grid step: big enough to amortize per-step overhead,
# small enough that double-buffered in+out fits every generation's scoped VMEM.
_TARGET_BLOCK_BYTES = 2 * 1024 * 1024


def identity(x: jax.Array) -> jax.Array:
    """Pallas implementation of Identity.forward: returns x unchanged.

    NOTE: outside of this exercise, Identity should simply `return x`
    (zero HBM traffic). Here we perform exactly one read+write pass.
    """
    orig_shape = x.shape

    # Degenerate ranks: present a 2-D view (free bitcast reshape of a
    # contiguous array), restore shape at the end.
    squeeze = False
    if x.ndim < 2:
        x = x.reshape(1, -1)
        squeeze = True

    shape = x.shape
    ndim = x.ndim
    itemsize = jnp.dtype(x.dtype).itemsize

    if ndim == 2:
        rows, cols = shape
        total_bytes = rows * cols * itemsize
        if total_bytes <= _TARGET_BLOCK_BYTES or rows <= 8:
            # Whole array as a single full-extent block.
            block = (rows, cols)
            grid = (1,)
        else:
            # Large sublane-aligned row tiles, full-extent columns.
            tile_r = max(
                8,
                (min(rows, max(1, _TARGET_BLOCK_BYTES // (cols * itemsize))) // 8) * 8,
            )
            block = (tile_r, cols)
            grid = (pl.cdiv(rows, tile_r),)
        index_map = lambda i: (i, 0)
    else:
        # Full-extent last two dims; group along axis -3 so each grid step
        # moves ~_TARGET_BLOCK_BYTES; remaining leading dims become grid axes.
        tail_bytes = shape[-1] * shape[-2] * itemsize
        d3 = shape[-3]
        if tail_bytes >= _TARGET_BLOCK_BYTES:
            b3 = 1
        else:
            cap = max(1, _TARGET_BLOCK_BYTES // tail_bytes)
            b3 = 1
            for cand in range(min(d3, cap), 0, -1):
                if d3 % cand == 0:
                    b3 = cand
                    break
        lead = shape[:-3]
        block = (1,) * len(lead) + (b3, shape[-2], shape[-1])
        grid = tuple(lead) + (d3 // b3,)

        def index_map(*idx):
            return idx + (0, 0)

    out = pl.pallas_call(
        _identity_kernel,
        out_shape=jax.ShapeDtypeStruct(shape, x.dtype),
        grid=grid,
        in_specs=[pl.BlockSpec(block, index_map)],
        out_specs=pl.BlockSpec(block, index_map),
        compiler_params=pltpu.CompilerParams(
            dimension_semantics=("parallel",) * len(grid)
        ),
    )(x)

    return out.reshape(orig_shape) if squeeze else out


if __name__ == "__main__":
    key = jax.random.PRNGKey(0)
    # Small NCHW input consistent with a typical conv-style module.
    x = jax.random.normal(key, (2, 4, 16, 16), dtype=jnp.float32)

    y = identity(x)
    jax.block_until_ready(y)

    assert y.shape == x.shape, (y.shape, x.shape)
    assert y.dtype == x.dtype, (y.dtype, x.dtype)
    assert bool(jnp.all(y == x)), "Identity output mismatch"

    print("KERNEL_OK")
</pallas_src>

<mosaic_0001>
module attributes {stable_mosaic.version = 11 : i64} {
  func.func @_identity_kernel(%arg0: i32, %arg1: i32, %arg2: memref<1x4x16x16xf32, #tpu.memory_space<vmem>>, %arg3: memref<1x4x16x16xf32, #tpu.memory_space<vmem>>) attributes {dimension_semantics = [#tpu.dimension_semantics<parallel>, #tpu.dimension_semantics<parallel>], iteration_bounds = array<i64: 2, 1>, scalar_prefetch = 0 : i64, scratch_operands = 0 : i64, tpu.core_type = #tpu.core_type<tc>, window_params = [{transform_indices = @transform_0, window_bounds = array<i64: 1, 4, 16, 16>}, {transform_indices = @transform_1, window_bounds = array<i64: 1, 4, 16, 16>}]} {
    %c0 = arith.constant 0 : index
    %c0_0 = arith.constant 0 : index
    %c0_1 = arith.constant 0 : index
    %c0_2 = arith.constant 0 : index
    %0 = vector.load %arg2[%c0, %c0_0, %c0_1, %c0_2] : memref<1x4x16x16xf32, #tpu.memory_space<vmem>>, vector<1x4x16x16xf32>
    %c0_3 = arith.constant 0 : index
    %c0_4 = arith.constant 0 : index
    %c0_5 = arith.constant 0 : index
    %c0_6 = arith.constant 0 : index
    %1 = vector.load %arg3[%c0_3, %c0_4, %c0_5, %c0_6] : memref<1x4x16x16xf32, #tpu.memory_space<vmem>>, vector<1x4x16x16xf32>
    tpu.vector_store %arg3[%c0_3, %c0_4, %c0_5, %c0_6], %0 {strides = array<i32>} : memref<1x4x16x16xf32, #tpu.memory_space<vmem>>, vector<1x4x16x16xf32>,
    return
  }
  func.func @transform_0(%arg0: i32, %arg1: i32) -> (i32, i32, i32, i32) {
    %c0_i32 = arith.constant 0 : i32
    %c0_i32_0 = arith.constant 0 : i32
    %c0_i32_1 = arith.constant 0 : i32
    return %arg0, %arg1, %c0_i32, %c0_i32_0 : i32, i32, i32, i32
  }
  func.func @transform_1(%arg0: i32, %arg1: i32) -> (i32, i32, i32, i32) {
    %c0_i32 = arith.constant 0 : i32
    %c0_i32_0 = arith.constant 0 : i32
    %c0_i32_1 = arith.constant 0 : i32
    return %arg0, %arg1, %c0_i32, %c0_i32_0 : i32, i32, i32, i32
  }
}

</mosaic_0001>

<llo_original>
// kernel: tpu_custom_call.1
$region0: #{tpu_custom_call.1}
  #allocation0 [shape = 'u32[]', space=smem, size = 0x4, offset = 0x4, fixed_abs, tag = 'smem constant byte address 0x4 - core index']
  #allocation1 [shape = 'u32[144,128]{1,0:T(1,128)}', space=vmem, size = 0x12000, scoped, tag = 'internal scratch']
  %s0 = inlined_call_operand.hbm [shape: f32[2,4,16,16], index: 0, kind: input, shape index: {}]
  %s1 = inlined_call_operand.hbm [shape: f32[2,4,16,16], index: 1, kind: output, shape index: {}]
  %s2 = sld [smem:[#allocation0]]
  $region41: #{tpu_custom_call.1} parent=0
    _
  %s4 = ssub.s32 1, %s2
  %s5 = scalar_select 0, %s4, %s2
  $region1: #{tpu_custom_call.1} parent=0
    #allocation2 [shape = 'u8[65536]{0}', space=vmem, size = 0x10000, scoped, tag = 'input window, operand 0']
    #allocation3 [shape = 's32[2]{0}', space=sflag, size = 0x8, scoped, tag = 'scoped memory for tpu_custom_call.1']
    #allocation4 [shape = 's32[2]{0}', space=sflag, size = 0x8, scoped, tag = 'scoped memory for tpu_custom_call.1']
    #allocation5 [shape = 'u8[65536]{0}', space=vmem, size = 0x10000, scoped, tag = 'output window, operand 0']
    %6 = vsyncpa [#allocation3], 0
    %s7 = scalar_lea.sflag [#allocation3], 1
    %8 = vsyncpa %s7, 0
    %9 = vsyncpa [#allocation4], 0
    %s10 = scalar_lea.sflag [#allocation4], 1
    %11 = vsyncpa %s10, 0
    loop: start=0, step=1, limit=4
    $region2: #{tpu_custom_call.1} parent=1 // loop_pre_header
      _
    $region3: #{tpu_custom_call.1} parent=1 // loop_header
      %s13 = sphi 0, %s17
      %p14 = scmp.ge.s32.totalorder %s13, 4
      %s20 = sphi 0, %s32
      %s21 = sphi 0, %s28
      %s22 = sphi 0, %s20
      %s23 = sphi 0, %s21
      %s24 = sphi 0, %s22
      %s25 = sphi 0, %s23
      %s37 = sphi 0, %s39
      %s40 = sphi 0, %s37
      %s41 = sphi 0, %s40
      %s57 = sphi 0, %s41
      %s65 = sphi 0, %s67
      %s68 = sphi 0, %s65
      %s69 = sphi 0, %s68
      %s85 = sphi 0, %s69
    $region4: #{tpu_custom_call.1} parent=1 // loop_header_branch
      %16 = sbr.rel (%p14) target = $region8
    $region5: #{tpu_custom_call.1} parent=1 // loop_body
      %s18 = ssub.s32 %s13, 1
      %s19 = ssub.s32 %s13, 2
      %s26 = sadd.s32 1, %s21
      %p27 = scmp.ge.s32.totalorder %s26, 1
      %s28 = scalar_select %p27, 0, %s26
      %s29 = sadd.s32 1, %s20
      %s30 = scalar_select %p27, %s29, %s20
      %p31 = scmp.ge.s32.totalorder %s30, 2
      %s32 = scalar_select %p31, 0, %s30
      %s33 = ssub.s32 %s20, %s32
      %s34 = ssub.s32 %s21, %s28
      %s35 = sor.u32 %s33, %s34
      %p36 = scmp.eq.s32.totalorder %s35, 0
      %s38 = sadd.s32 %s37, 1
      %s39 = scalar_select %p36, %s37, %s38
      %p42 = pneg %p36
      %p43 = scmp.eq.s32.totalorder %s13, 1
      %p44 = por %p42, %p43
      %p45 = scmp.ne.s32.totalorder %s37, %s40
      %p46 = scmp.eq.s32.totalorder %s13, 0
      %p47 = por %p45, %p46
      %p48 = scmp.ne.s32.totalorder %s37, %s40
      %p49 = scmp.eq.s32.totalorder %s18, 1
      %p50 = por %p48, %p49
      %p51 = scmp.ne.s32.totalorder %s40, %s41
      %p52 = scmp.eq.s32.totalorder %s18, 0
      %p53 = por %p51, %p52
      %p54 = scmp.ne.s32.totalorder %s40, %s41
      %p55 = scmp.eq.s32.totalorder %s19, 1
      %p56 = por %p54, %p55
      %p58 = scmp.ne.s32.totalorder %s41, %s57
      %p59 = scmp.eq.s32.totalorder %s19, 0
      %p60 = por %p58, %p59
      %s61 = ssub.s32 %s20, %s32
      %s62 = ssub.s32 %s21, %s28
      %s63 = sor.u32 %s61, %s62
      %p64 = scmp.eq.s32.totalorder %s63, 0
      %s66 = sadd.s32 %s65, 1
      %s67 = scalar_select %p64, %s65, %s66
      %p70 = pneg %p64
      %p71 = scmp.eq.s32.totalorder %s13, 1
      %p72 = por %p70, %p71
      %p73 = scmp.ne.s32.totalorder %s65, %s68
      %p74 = scmp.eq.s32.totalorder %s13, 0
      %p75 = por %p73, %p74
      %p76 = scmp.ne.s32.totalorder %s65, %s68
      %p77 = scmp.eq.s32.totalorder %s18, 1
      %p78 = por %p76, %p77
      %p79 = scmp.ne.s32.totalorder %s68, %s69
      %p80 = scmp.eq.s32.totalorder %s18, 0
      %p81 = por %p79, %p80
      %p82 = scmp.ne.s32.totalorder %s68, %s69
      %p83 = scmp.eq.s32.totalorder %s19, 1
      %p84 = por %p82, %p83
      %p86 = scmp.ne.s32.totalorder %s69, %s85
      %p87 = scmp.eq.s32.totalorder %s19, 0
      %p88 = por %p86, %p87
      %p89 = scmp.le.s32.totalorder 1, %s13
      %p90 = scmp.lt.s32.totalorder %s13, 3
      %p91 = pnand %p89, %p90
      %p92 = pneg %p91
      // Predicated region
      $region9: #{tpu_custom_call.1} parent=5 // pred_check
        _
      $region10: #{tpu_custom_call.1} parent=5 // pred_check_branch
        %94 = sbr.rel (%p91) target = $region12
      $region11: #{tpu_custom_call.1} parent=5 // pred_region
        %s95 = ssub.s32 %s13, 1
      $region12: #{tpu_custom_call.1} parent=5 // pred_fallthru
        _
      %p96 = scmp.lt.s32.totalorder %s13, 2
      // Predicated region
      $region13: #{tpu_custom_call.1} parent=5 // pred_check
        %p97 = pneg %p96
      $region14: #{tpu_custom_call.1} parent=5 // pred_check_branch
        %99 = sbr.rel (%p97) target = $region16
      $region15: #{tpu_custom_call.1} parent=5 // pred_region
        // Predicated region
        $region17: #{tpu_custom_call.1} parent=15 // pred_check
          %p100 = pneg %p47
        $region18: #{tpu_custom_call.1} parent=15 // pred_check_branch
          %102 = sbr.rel (%p100) target = $region20
        $region19: #{tpu_custom_call.1} parent=15 // pred_region
          %s103 = sand.u32 %s37, 1
          %s104 = scalar_lea.sflag [#allocation3], %s103
          %s105 = sand.u32 %s37, 1
          %s106 = smul.addr %s105, 64
          %s107 = scalar_lea.vmem [#allocation2], %s106
          %s108 = smul.u32 4, %s21
          %s110 = ssub.s32 1024, 1024
          %111 = vsyncadd %s104, %s110
          %s112 = smul.addr %s108, 2
          %s113 = smul.addr %s20, 8
          %s114 = sadd.s32 %s112, %s113
          %s115 = smul.addr %s114, 128
          %s116 = scalar_lea.hbm %s0, %s115
          %s117 = sshll.u32 %s107, 4
          %s118 = int_to_ptr.vmem [resolvable:$true] %s117
          %123 = dma.hbm_to_vmem [thread:$0]  %s116, 1024, %s118, %s104, 128, 128, 8
        $region20: #{tpu_custom_call.1} parent=15 // pred_fallthru
          _
      $region16: #{tpu_custom_call.1} parent=5 // pred_fallthru
        _
      %p124 = scmp.le.s32.totalorder 1, %s13
      %p125 = scmp.lt.s32.totalorder %s13, 3
      %p126 = pnand %p124, %p125
      %p127 = pneg %p126
      // Predicated region
      $region21: #{tpu_custom_call.1} parent=5 // pred_check
        _
      $region22: #{tpu_custom_call.1} parent=5 // pred_check_branch
        %129 = sbr.rel (%p126) target = $region24
      $region23: #{tpu_custom_call.1} parent=5 // pred_region
        %s130 = ssub.s32 %s13, 1
        %s131 = sand.u32 %s40, 1
        %s132 = scalar_lea.sflag [#allocation3], %s131
        %s133 = sand.u32 %s40, 1
        %s134 = smul.addr %s133, 64
        %s135 = scalar_lea.vmem [#allocation2], %s134
        // Predicated region
        $region25: #{tpu_custom_call.1} parent=23 // pred_check
          %p136 = pneg %p53
        $region26: #{tpu_custom_call.1} parent=23 // pred_check_branch
          %138 = sbr.rel (%p136) target = $region28
        $region27: #{tpu_custom_call.1} parent=23 // pred_region
          %139 = dma.done %s132, 1024
        $region28: #{tpu_custom_call.1} parent=23 // pred_fallthru
          _
        %s140 = sand.u32 %s40, 1
        %s141 = scalar_lea.sflag [#allocation3], %s140
        %s142 = sand.u32 %s40, 1
        %s143 = smul.addr %s142, 64
        %s144 = scalar_lea.vmem [#allocation2], %s143
        %p145 = pneg %p53
        %p146 = pneg %p50
        %p147 = pneg %p81
        %p148 = pneg %p78
        %s149 = sand.u32 %s68, 1
        %s150 = scalar_lea.sflag [#allocation4], %s149
        %s151 = sand.u32 %s68, 1
        %s152 = smul.addr %s151, 64
        %s153 = scalar_lea.vmem [#allocation5], %s152
        %s154 = smul.u32 4, %s23
        %s155 = smul.u32 4, %s23
        %v156 = vld [vmem:[%s135] sm:$0xff]
        %v157 = vld [vmem:[%s135 + $0x8] sm:$0xff]
        %v158 = vld [vmem:[%s135 + $0x10] sm:$0xff]
        %v159 = vld [vmem:[%s135 + $0x18] sm:$0xff]
        %v160 = vld [vmem:[%s135 + $0x20] sm:$0xff]
        %v161 = vld [vmem:[%s135 + $0x28] sm:$0xff]
        %v162 = vld [vmem:[%s135 + $0x30] sm:$0xff]
        %v163 = vld [vmem:[%s135 + $0x38] sm:$0xff]
        %vm164 = vcmask 130048
        %165 = vst.msk [vmem:[%s153] sm:$0xff] %vm164, %v156
        %166 = vst.msk [vmem:[%s153 + $0x8] sm:$0xff] %vm164, %v157
        %167 = vst.msk [vmem:[%s153 + $0x10] sm:$0xff] %vm164, %v158
        %168 = vst.msk [vmem:[%s153 + $0x18] sm:$0xff] %vm164, %v159
        %169 = vst.msk [vmem:[%s153 + $0x20] sm:$0xff] %vm164, %v160
        %170 = vst.msk [vmem:[%s153 + $0x28] sm:$0xff] %vm164, %v161
        %171 = vst.msk [vmem:[%s153 + $0x30] sm:$0xff] %vm164, %v162
        %172 = vst.msk [vmem:[%s153 + $0x38] sm:$0xff] %vm164, %v163
        %s173 = sand.u32 %s68, 1
        %s174 = scalar_lea.sflag [#allocation4], %s173
        %s175 = sand.u32 %s68, 1
        %s176 = smul.addr %s175, 64
        %s177 = scalar_lea.vmem [#allocation5], %s176
        // Predicated region
        $region29: #{tpu_custom_call.1} parent=23 // pred_check
          %p178 = pneg %p78
        $region30: #{tpu_custom_call.1} parent=23 // pred_check_branch
          %180 = sbr.rel (%p178) target = $region32
        $region31: #{tpu_custom_call.1} parent=23 // pred_region
          %s181 = smul.u32 4, %s23
          %s183 = ssub.s32 1024, 1024
          %184 = vsyncadd %s174, %s183
          %s185 = smul.addr %s181, 2
          %s186 = smul.addr %s22, 8
          %s187 = sadd.s32 %s185, %s186
          %s188 = smul.addr %s187, 128
          %s189 = scalar_lea.hbm %s1, %s188
          %s190 = sshll.u32 %s177, 4
          %s191 = int_to_ptr.vmem [resolvable:$true] %s190
          %196 = dma.vmem_to_hbm [thread:$0]  %s191, 1024, %s189, %s174, 128, 128, 8
        $region32: #{tpu_custom_call.1} parent=23 // pred_fallthru
          _
      $region24: #{tpu_custom_call.1} parent=5 // pred_fallthru
        _
      %p197 = scmp.le.s32.totalorder 2, %s13
      // Predicated region
      $region33: #{tpu_custom_call.1} parent=5 // pred_check
        %p198 = pneg %p197
      $region34: #{tpu_custom_call.1} parent=5 // pred_check_branch
        %200 = sbr.rel (%p198) target = $region36
      $region35: #{tpu_custom_call.1} parent=5 // pred_region
        %s201 = ssub.s32 %s13, 2
        // Predicated region
        $region37: #{tpu_custom_call.1} parent=35 // pred_check
          %p202 = pneg %p84
        $region38: #{tpu_custom_call.1} parent=35 // pred_check_branch
          %204 = sbr.rel (%p202) target = $region40
        $region39: #{tpu_custom_call.1} parent=35 // pred_region
          %s205 = sand.u32 %s69, 1
          %s206 = scalar_lea.sflag [#allocation4], %s205
          %s207 = sand.u32 %s69, 1
          %s208 = smul.addr %s207, 64
          %s209 = scalar_lea.vmem [#allocation5], %s208
          %210 = dma.done %s206, 1024
        $region40: #{tpu_custom_call.1} parent=35 // pred_fallthru
          _
      $region36: #{tpu_custom_call.1} parent=5 // pred_fallthru
        _
    $region6: #{tpu_custom_call.1} parent=1 // loop_footer
      %s17 = sadd.s32 1, %s13
    $region7: #{tpu_custom_call.1} parent=1 // loop_footer_branch
      %12 = sbr.rel target = $region3
    $region8: #{tpu_custom_call.1} parent=1 // loop_exit
      _
    %211 = vsyncpa [#allocation3], 1
    %s212 = scalar_lea.sflag [#allocation3], 1
    %213 = vsyncpa %s212, 1
    %214 = vsyncpa [#allocation4], 1
    %s215 = scalar_lea.sflag [#allocation4], 1
    %216 = vsyncpa %s215, 1

</llo_original>
